<compile_context>
chip_gen: v7x
topology: tpu7x:2x2x1
jax: 0.10.0
libtpu: 0.0.40
codegen_flags: <defaults>
</compile_context>

<pallas_src>
import jax
import jax.numpy as jnp
from jax import lax
from jax.experimental import pallas as pl
from jax.experimental.pallas import tpu as pltpu


def _gelu_exact(x):
    # PyTorch nn.GELU() default (erf-based, exact); computed in f32.
    # (A tanh-approx GELU would ride the EUP slot on v6e/v7x, but deviates
    #  from the PyTorch module; exact erf is kept for fidelity.)
    return 0.5 * x * (1.0 + lax.erf(x * jnp.float32(0.7071067811865476)))


def _softplus(x):
    # Numerically stable softplus: log(1+exp(x)) = max(x,0) + log1p(exp(-|x|)).
    return jnp.maximum(x, 0.0) + jnp.log1p(jnp.exp(-jnp.abs(x)))


def ecml_kernel(ht_ref, hi_ref, wt_ref, bt_ref, wi_ref, bi_ref, out_ref):
    ht = ht_ref[...]                     # f32, read from HBM exactly once
    hi = hi_ref[...]                     # f32

    # --- text head: GELU -> Linear(768, C) -> softplus --------------------
    gt = _gelu_exact(ht)
    t_logit = jnp.dot(gt, wt_ref[...], preferred_element_type=jnp.float32)
    t_evi = _softplus(t_logit + bt_ref[...])

    # --- image head: ReLU -> Linear(1000, C) -> softplus ------------------
    gi = jnp.maximum(hi, 0.0)
    i_logit = jnp.dot(gi, wi_ref[...], preferred_element_type=jnp.float32)
    i_evi = _softplus(i_logit + bi_ref[...])

    # --- ABF fusion (average belief fusion of Dirichlet opinions) ---------
    # S = sum(evidence + 1) = sum(evidence) + K.  The full opinion chain
    # (b, u, b_a, u_a, S_a) reduces exactly to:
    #   e_a = (t_evi*S_i + i_evi*S_t) / (S_t + S_i)
    K = jnp.float32(wt_ref.shape[1])
    S_t = jnp.sum(t_evi, axis=-1, keepdims=True) + K
    S_i = jnp.sum(i_evi, axis=-1, keepdims=True) + K
    # Exact divide over a (TB,1) column: essentially free, keeps bit-closeness.
    fused = (t_evi * S_i + i_evi * S_t) / (S_t + S_i)

    # Single lane-packed output slab: [i_evi | t_evi | fused] -> one DMA/step.
    out_ref[...] = jnp.concatenate([i_evi, t_evi, fused], axis=-1).astype(
        out_ref.dtype)


def _pick_tb(B, tb):
    if B <= tb:
        return B
    TB = max(16, (tb // 16) * 16)        # multiple of 16 (bf16-safe sublanes)
    # Give v7x's two TensorCores >=2 pipelined steps each when B allows,
    # while keeping tiles >=512 rows so the ~0.35us/step overhead stays small.
    while TB >= 1024 and -(-B // TB) < 4:
        TB //= 2
    return TB


def ecml_forward(ht, hi, wt, bt, wi, bi, *, tb=1024):
    B, Dt = ht.shape
    Di = hi.shape[1]
    C = wt.shape[1]

    TB = _pick_tb(B, tb)

    # Activations/weights stay in their native f32: no wrapper-side convert
    # passes over HBM.  Only the biases get a trivial (1, C) reshape.
    bt2 = bt.reshape(1, C).astype(jnp.float32)
    bi2 = bi.reshape(1, C).astype(jnp.float32)

    grid = (pl.cdiv(B, TB),)
    out_shape = jax.ShapeDtypeStruct((B, 3 * C), jnp.float32)

    cost = pl.CostEstimate(
        flops=2 * B * (Dt + Di) * C,
        transcendentals=B * (Dt + 4 * C),            # erf + softplus exp/log
        bytes_accessed=4 * (B * (Dt + Di) + (Dt + Di + 2) * C + B * 3 * C),
    )

    packed = pl.pallas_call(
        ecml_kernel,
        out_shape=out_shape,
        grid=grid,
        in_specs=[
            pl.BlockSpec((TB, Dt), lambda i: (i, 0)),   # ht  (batch-tiled, pipelined)
            pl.BlockSpec((TB, Di), lambda i: (i, 0)),   # hi  (batch-tiled, pipelined)
            pl.BlockSpec((Dt, C), lambda i: (0, 0)),    # Wt  (VMEM-resident)
            pl.BlockSpec((1, C), lambda i: (0, 0)),     # bt  (VMEM-resident)
            pl.BlockSpec((Di, C), lambda i: (0, 0)),    # Wi  (VMEM-resident)
            pl.BlockSpec((1, C), lambda i: (0, 0)),     # bi  (VMEM-resident)
        ],
        out_specs=pl.BlockSpec((TB, 3 * C), lambda i: (i, 0)),
        compiler_params=pltpu.CompilerParams(
            dimension_semantics=("parallel",),
            vmem_limit_bytes=48 * 1024 * 1024,
        ),
        cost_estimate=cost,
    )(ht, hi, wt, bt2, wi, bi2)

    i_evi = packed[:, 0:C]
    t_evi = packed[:, C:2 * C]
    fused = packed[:, 2 * C:3 * C]
    return i_evi, t_evi, fused


def ecml_reference(ht, hi, wt, bt, wi, bi):
    """Pure-JAX f32 reference of the same math (sanity check)."""
    t_evi = jax.nn.softplus(jax.nn.gelu(ht, approximate=False) @ wt + bt)
    i_evi = jax.nn.softplus(jnp.maximum(hi, 0.0) @ wi + bi)
    K = jnp.float32(wt.shape[1])
    S_t = jnp.sum(t_evi + 1.0, -1, keepdims=True)
    S_i = jnp.sum(i_evi + 1.0, -1, keepdims=True)
    b_a = 0.5 * (t_evi / S_t + i_evi / S_i)
    u_a = 0.5 * (K / S_t + K / S_i)
    return i_evi, t_evi, b_a * (K / u_a)


if __name__ == "__main__":
    B, D_TXT, D_IMG, C = 2, 768, 1000, 8   # batch, BERT hidden, resnet50 logits, n_classes

    key = jax.random.PRNGKey(0)
    k_ht, k_hi, k_wt, k_bt, k_wi, k_bi = jax.random.split(key, 6)

    # Stand-ins for encoder outputs (pretrained encoders not translated).
    ht = jax.random.normal(k_ht, (B, D_TXT), jnp.float32)
    hi = jax.random.normal(k_hi, (B, D_IMG), jnp.float32)

    # Deterministic classifier-head parameters (same shapes as nn.Linear's).
    wt = jax.random.normal(k_wt, (D_TXT, C), jnp.float32) * 0.02
    bt = jax.random.normal(k_bt, (C,), jnp.float32) * 0.02
    wi = jax.random.normal(k_wi, (D_IMG, C), jnp.float32) * 0.02
    bi = jax.random.normal(k_bi, (C,), jnp.float32) * 0.02

    i_evi, t_evi, fused = jax.block_until_ready(
        ecml_forward(ht, hi, wt, bt, wi, bi))

    ri, rt, rf = ecml_reference(ht, hi, wt, bt, wi, bi)
    # Full-f32 kernel path -> tight tolerances vs the f32 reference.
    assert jnp.allclose(i_evi, ri, atol=1e-3, rtol=1e-3)
    assert jnp.allclose(t_evi, rt, atol=1e-3, rtol=1e-3)
    assert jnp.allclose(fused, rf, atol=1e-3, rtol=1e-3)

    print("KERNEL_OK")
</pallas_src>

<mosaic_0001>
module attributes {stable_mosaic.version = 11 : i64} {
  func.func @ecml_kernel(%arg0: i32, %arg1: memref<2x768xf32, #tpu.memory_space<vmem>>, %arg2: memref<2x1000xf32, #tpu.memory_space<vmem>>, %arg3: memref<768x8xf32, #tpu.memory_space<vmem>>, %arg4: memref<1x8xf32, #tpu.memory_space<vmem>>, %arg5: memref<1000x8xf32, #tpu.memory_space<vmem>>, %arg6: memref<1x8xf32, #tpu.memory_space<vmem>>, %arg7: memref<2x24xf32, #tpu.memory_space<vmem>>) attributes {dimension_semantics = [#tpu.dimension_semantics<parallel>], iteration_bounds = array<i64: 1>, scalar_prefetch = 0 : i64, scratch_operands = 0 : i64, tpu.core_type = #tpu.core_type<tc>, window_params = [{transform_indices = @transform_0, window_bounds = array<i64: 2, 768>}, {transform_indices = @transform_1, window_bounds = array<i64: 2, 1000>}, {pipeline_mode = #tpu.pipeline_mode<synchronous>, transform_indices = @transform_2, window_bounds = array<i64: 768, 8>}, {pipeline_mode = #tpu.pipeline_mode<synchronous>, transform_indices = @transform_3, window_bounds = array<i64: 1, 8>}, {pipeline_mode = #tpu.pipeline_mode<synchronous>, transform_indices = @transform_4, window_bounds = array<i64: 1000, 8>}, {pipeline_mode = #tpu.pipeline_mode<synchronous>, transform_indices = @transform_5, window_bounds = array<i64: 1, 8>}, {transform_indices = @transform_6, window_bounds = array<i64: 2, 24>}]} {
    %c0 = arith.constant 0 : index
    %c0_0 = arith.constant 0 : index
    %0 = vector.load %arg1[%c0, %c0_0] : memref<2x768xf32, #tpu.memory_space<vmem>>, vector<2x768xf32>
    %c0_1 = arith.constant 0 : index
    %c0_2 = arith.constant 0 : index
    %1 = vector.load %arg2[%c0_1, %c0_2] : memref<2x1000xf32, #tpu.memory_space<vmem>>, vector<2x1000xf32>
    %cst = arith.constant 5.000000e-01 : f32
    %2 = vector.broadcast %cst : f32 to vector<2x768xf32>
    %3 = arith.mulf %2, %0 : vector<2x768xf32>
    %cst_3 = arith.constant 0.707106769 : f32
    %4 = vector.broadcast %cst_3 : f32 to vector<2x768xf32>
    %5 = arith.mulf %0, %4 : vector<2x768xf32>
    %6 = math.erf %5 : vector<2x768xf32>
    %cst_4 = arith.constant 1.000000e+00 : f32
    %7 = vector.broadcast %cst_4 : f32 to vector<2x768xf32>
    %8 = arith.addf %7, %6 : vector<2x768xf32>
    %9 = arith.mulf %3, %8 : vector<2x768xf32>
    %c0_5 = arith.constant 0 : index
    %c0_6 = arith.constant 0 : index
    %10 = vector.load %arg3[%c0_5, %c0_6] : memref<768x8xf32, #tpu.memory_space<vmem>>, vector<768x8xf32>
    %cst_7 = arith.constant dense<0.000000e+00> : vector<2x8xf32>
    %11 = tpu.matmul %9, %10, %cst_7 {dimension_numbers = #tpu.dot_dimension_numbers<[1], [0], [0], [1], [0, 0, 1, 1], [], []>} : vector<2x768xf32>, vector<768x8xf32>, vector<2x8xf32> -> vector<2x8xf32>
    %c0_8 = arith.constant 0 : index
    %c0_9 = arith.constant 0 : index
    %12 = vector.load %arg4[%c0_8, %c0_9] : memref<1x8xf32, #tpu.memory_space<vmem>>, vector<1x8xf32>
    %13 = vector.broadcast %12 : vector<1x8xf32> to vector<2x8xf32>
    %14 = arith.addf %11, %13 : vector<2x8xf32>
    %cst_10 = arith.constant 0.000000e+00 : f32
    %15 = vector.broadcast %cst_10 : f32 to vector<2x8xf32>
    %16 = arith.maximumf %14, %15 : vector<2x8xf32>
    %17 = math.absf %14 : vector<2x8xf32>
    %cst_11 = arith.constant 0.000000e+00 : f32
    %18 = vector.broadcast %cst_11 : f32 to vector<2x8xf32>
    %19 = arith.subf %18, %17 : vector<2x8xf32>
    %20 = math.exp %19 : vector<2x8xf32>
    %21 = math.log1p %20 : vector<2x8xf32>
    %22 = arith.addf %16, %21 : vector<2x8xf32>
    %cst_12 = arith.constant 0.000000e+00 : f32
    %23 = vector.broadcast %cst_12 : f32 to vector<2x1000xf32>
    %24 = arith.maximumf %1, %23 : vector<2x1000xf32>
    %c0_13 = arith.constant 0 : index
    %c0_14 = arith.constant 0 : index
    %25 = vector.load %arg5[%c0_13, %c0_14] : memref<1000x8xf32, #tpu.memory_space<vmem>>, vector<1000x8xf32>
    %cst_15 = arith.constant dense<0.000000e+00> : vector<2x8xf32>
    %26 = tpu.matmul %24, %25, %cst_15 {dimension_numbers = #tpu.dot_dimension_numbers<[1], [0], [0], [1], [0, 0, 1, 1], [], []>} : vector<2x1000xf32>, vector<1000x8xf32>, vector<2x8xf32> -> vector<2x8xf32>
    %c0_16 = arith.constant 0 : index
    %c0_17 = arith.constant 0 : index
    %27 = vector.load %arg6[%c0_16, %c0_17] : memref<1x8xf32, #tpu.memory_space<vmem>>, vector<1x8xf32>
    %28 = vector.broadcast %27 : vector<1x8xf32> to vector<2x8xf32>
    %29 = arith.addf %26, %28 : vector<2x8xf32>
    %cst_18 = arith.constant 0.000000e+00 : f32
    %30 = vector.broadcast %cst_18 : f32 to vector<2x8xf32>
    %31 = arith.maximumf %29, %30 : vector<2x8xf32>
    %32 = math.absf %29 : vector<2x8xf32>
    %cst_19 = arith.constant 0.000000e+00 : f32
    %33 = vector.broadcast %cst_19 : f32 to vector<2x8xf32>
    %34 = arith.subf %33, %32 : vector<2x8xf32>
    %35 = math.exp %34 : vector<2x8xf32>
    %36 = math.log1p %35 : vector<2x8xf32>
    %37 = arith.addf %31, %36 : vector<2x8xf32>
    %cst_20 = arith.constant dense<0.000000e+00> : vector<2xf32>
    %38 = vector.multi_reduction <add>, %22, %cst_20 [1] : vector<2x8xf32> to vector<2xf32>
    %39 = vector.shape_cast %38 : vector<2xf32> to vector<2x1xf32>
    %cst_21 = arith.constant 8.000000e+00 : f32
    %40 = vector.broadcast %cst_21 : f32 to vector<2x1xf32>
    %41 = arith.addf %39, %40 : vector<2x1xf32>
    %cst_22 = arith.constant dense<0.000000e+00> : vector<2xf32>
    %42 = vector.multi_reduction <add>, %37, %cst_22 [1] : vector<2x8xf32> to vector<2xf32>
    %43 = vector.shape_cast %42 : vector<2xf32> to vector<2x1xf32>
    %cst_23 = arith.constant 8.000000e+00 : f32
    %44 = vector.broadcast %cst_23 : f32 to vector<2x1xf32>
    %45 = arith.addf %43, %44 : vector<2x1xf32>
    %46 = vector.broadcast %45 : vector<2x1xf32> to vector<2x8xf32>
    %47 = arith.mulf %22, %46 : vector<2x8xf32>
    %48 = vector.broadcast %41 : vector<2x1xf32> to vector<2x8xf32>
    %49 = arith.mulf %37, %48 : vector<2x8xf32>
    %50 = arith.addf %47, %49 : vector<2x8xf32>
    %51 = arith.addf %41, %45 : vector<2x1xf32>
    %52 = vector.broadcast %51 : vector<2x1xf32> to vector<2x8xf32>
    %53 = arith.divf %50, %52 : vector<2x8xf32>
    %54 = tpu.concatenate %37, %22, %53 in 1 : vector<2x8xf32>, vector<2x8xf32>, vector<2x8xf32> -> vector<2x24xf32>
    %c0_24 = arith.constant 0 : index
    %c0_25 = arith.constant 0 : index
    %55 = vector.load %arg7[%c0_24, %c0_25] : memref<2x24xf32, #tpu.memory_space<vmem>>, vector<2x24xf32>
    tpu.vector_store %arg7[%c0_24, %c0_25], %54 {strides = array<i32>} : memref<2x24xf32, #tpu.memory_space<vmem>>, vector<2x24xf32>,
    return
  }
  func.func @transform_0(%arg0: i32) -> (i32, i32) {
    %c0_i32 = arith.constant 0 : i32
    %c0_i32_0 = arith.constant 0 : i32
    return %arg0, %c0_i32 : i32, i32
  }
  func.func @transform_1(%arg0: i32) -> (i32, i32) {
    %c0_i32 = arith.constant 0 : i32
    %c0_i32_0 = arith.constant 0 : i32
    return %arg0, %c0_i32 : i32, i32
  }
  func.func @transform_2(%arg0: i32) -> (i32, i32) {
    %c0_i32 = arith.constant 0 : i32
    %c0_i32_0 = arith.constant 0 : i32
    %c0_i32_1 = arith.constant 0 : i32
    return %c0_i32, %c0_i32_0 : i32, i32
  }
  func.func @transform_3(%arg0: i32) -> (i32, i32) {
    %c0_i32 = arith.constant 0 : i32
    %c0_i32_0 = arith.constant 0 : i32
    %c0_i32_1 = arith.constant 0 : i32
    return %c0_i32, %c0_i32_0 : i32, i32
  }
  func.func @transform_4(%arg0: i32) -> (i32, i32) {
    %c0_i32 = arith.constant 0 : i32
    %c0_i32_0 = arith.constant 0 : i32
    %c0_i32_1 = arith.constant 0 : i32
    return %c0_i32, %c0_i32_0 : i32, i32
  }
  func.func @transform_5(%arg0: i32) -> (i32, i32) {
    %c0_i32 = arith.constant 0 : i32
    %c0_i32_0 = arith.constant 0 : i32
    %c0_i32_1 = arith.constant 0 : i32
    return %c0_i32, %c0_i32_0 : i32, i32
  }
  func.func @transform_6(%arg0: i32) -> (i32, i32) {
    %c0_i32 = arith.constant 0 : i32
    %c0_i32_0 = arith.constant 0 : i32
    return %arg0, %c0_i32 : i32, i32
  }
}

</mosaic_0001>

<llo_original>
// kernel: tpu_custom_call.1
$region0: #{tpu_custom_call.1}
  #allocation0 [shape = 'u32[]', space=smem, size = 0x4, offset = 0x4, fixed_abs, tag = 'smem constant byte address 0x4 - core index']
  #allocation1 [shape = 'u32[144,128]{1,0:T(1,128)}', space=vmem, size = 0x12000, scoped, tag = 'internal scratch']
  %s0 = inlined_call_operand.vmem [shape: f32[2,768], index: 0, kind: input, shape index: {}]
  %s1 = inlined_call_operand.vmem [shape: f32[2,1000], index: 1, kind: input, shape index: {}]
  %s2 = inlined_call_operand.vmem [shape: f32[768,8], index: 2, kind: input, shape index: {}]
  %s3 = inlined_call_operand.vmem [shape: f32[1,8], index: 3, kind: input, shape index: {}]
  %s4 = inlined_call_operand.vmem [shape: f32[1000,8], index: 4, kind: input, shape index: {}]
  %s5 = inlined_call_operand.vmem [shape: f32[1,8], index: 5, kind: input, shape index: {}]
  %s6 = inlined_call_operand.hbm [shape: f32[2,24], index: 6, kind: output, shape index: {}]
  %s7 = sld [smem:[#allocation0]]
  $region34: #{tpu_custom_call.1} parent=0
    _
  %s9 = ssub.s32 1, %s7
  %s10 = scalar_select 0, %s9, %s7
  $region1: #{tpu_custom_call.1} parent=0
    #allocation2 [shape = 'u8[1024]{0}', space=vmem, size = 0x400, scoped, tag = 'output window, operand 0, single buffered']
    #allocation3 [shape = 's32[1]{0}', space=sflag, size = 0x4, scoped, tag = 'scoped memory for tpu_custom_call.1']
    %11 = vsyncpa [#allocation3], 0
    // Predicated region
    $region2: #{tpu_custom_call.1} parent=1 // pred_check
      _
    $region3: #{tpu_custom_call.1} parent=1 // pred_check_branch
      %13 = sbr.rel (0) target = $region5
    $region4: #{tpu_custom_call.1} parent=1 // pred_region
      _
    $region5: #{tpu_custom_call.1} parent=1 // pred_fallthru
      _
    // Predicated region
    $region6: #{tpu_custom_call.1} parent=1 // pred_check
      _
    $region7: #{tpu_custom_call.1} parent=1 // pred_check_branch
      %15 = sbr.rel (0) target = $region9
    $region8: #{tpu_custom_call.1} parent=1 // pred_region
      _
    $region9: #{tpu_custom_call.1} parent=1 // pred_fallthru
      _
    // Predicated region
    $region10: #{tpu_custom_call.1} parent=1 // pred_check
      _
    $region11: #{tpu_custom_call.1} parent=1 // pred_check_branch
      %17 = sbr.rel (0) target = $region13
    $region12: #{tpu_custom_call.1} parent=1 // pred_region
      _
    $region13: #{tpu_custom_call.1} parent=1 // pred_fallthru
      _
    // Predicated region
    $region14: #{tpu_custom_call.1} parent=1 // pred_check
      _
    $region15: #{tpu_custom_call.1} parent=1 // pred_check_branch
      %19 = sbr.rel (0) target = $region17
    $region16: #{tpu_custom_call.1} parent=1 // pred_region
      _
    $region17: #{tpu_custom_call.1} parent=1 // pred_fallthru
      _
    // Predicated region
    $region18: #{tpu_custom_call.1} parent=1 // pred_check
      _
    $region19: #{tpu_custom_call.1} parent=1 // pred_check_branch
      %21 = sbr.rel (0) target = $region21
    $region20: #{tpu_custom_call.1} parent=1 // pred_region
      _
    $region21: #{tpu_custom_call.1} parent=1 // pred_fallthru
      _
    // Predicated region
    $region22: #{tpu_custom_call.1} parent=1 // pred_check
      _
    $region23: #{tpu_custom_call.1} parent=1 // pred_check_branch
      %23 = sbr.rel (0) target = $region25
    $region24: #{tpu_custom_call.1} parent=1 // pred_region
      _
    $region25: #{tpu_custom_call.1} parent=1 // pred_fallthru
      _
    %v24 = vld [vmem:[%s0] sm:$0xff]
    %v25 = vld [vmem:[%s0 + $0x8] sm:$0xf]
    %v26 = vld [vmem:[%s1] sm:$0xff]
    %v27 = vld [vmem:[%s1 + $0x8] sm:$0xff]
    %v28 = vmul.f32 %v24, 0.5
    %v29 = vmul.f32 %v25, 0.5
    %v30 = vmul.f32 %v24, 0.70710677
    %v31 = vmul.f32 %v25, 0.70710677
    %v32 = verf.f32.pop %v30
    %v33 = verf.f32.pop %v31
    %v34 = vadd.f32 %v32, 1.0
    %v35 = vadd.f32 %v33, 1.0
    %v36 = vmul.f32 %v28, %v34
    %v37 = vmul.f32 %v29, %v35
    %v38 = vld [vmem:[%s2] sm:$0xff]
    %v39 = vld [vmem:[%s2 + $0x8] sm:$0xff]
    %v40 = vld [vmem:[%s2 + $0x10] sm:$0xff]
    %v41 = vld [vmem:[%s2 + $0x18] sm:$0xff]
    %v42 = vld [vmem:[%s2 + $0x20] sm:$0xff]
    %v43 = vld [vmem:[%s2 + $0x28] sm:$0xff]
    %v44 = vld [vmem:[%s2 + $0x30] sm:$0xff]
    %v45 = vld [vmem:[%s2 + $0x38] sm:$0xff]
    %v46 = vld [vmem:[%s2 + $0x40] sm:$0xff]
    %v47 = vld [vmem:[%s2 + $0x48] sm:$0xff]
    %v48 = vld [vmem:[%s2 + $0x50] sm:$0xff]
    %v49 = vld [vmem:[%s2 + $0x58] sm:$0xff]
    %v50 = vld [vmem:[%s2 + $0x60] sm:$0xff]
    %v51 = vld [vmem:[%s2 + $0x68] sm:$0xff]
    %v52 = vld [vmem:[%s2 + $0x70] sm:$0xff]
    %v53 = vld [vmem:[%s2 + $0x78] sm:$0xff]
    %v54 = vld [vmem:[%s2 + $0x80] sm:$0xff]
    %v55 = vld [vmem:[%s2 + $0x88] sm:$0xff]
    %v56 = vld [vmem:[%s2 + $0x90] sm:$0xff]
    %v57 = vld [vmem:[%s2 + $0x98] sm:$0xff]
    %v58 = vld [vmem:[%s2 + $0xa0] sm:$0xff]
    %v59 = vld [vmem:[%s2 + $0xa8] sm:$0xff]
    %v60 = vld [vmem:[%s2 + $0xb0] sm:$0xff]
    %v61 = vld [vmem:[%s2 + $0xb8] sm:$0xff]
    %v62 = vld [vmem:[%s2 + $0xc0] sm:$0xff]
    %v63 = vld [vmem:[%s2 + $0xc8] sm:$0xff]
    %v64 = vld [vmem:[%s2 + $0xd0] sm:$0xff]
    %v65 = vld [vmem:[%s2 + $0xd8] sm:$0xff]
    %v66 = vld [vmem:[%s2 + $0xe0] sm:$0xff]
    %v67 = vld [vmem:[%s2 + $0xe8] sm:$0xff]
    %v68 = vld [vmem:[%s2 + $0xf0] sm:$0xff]
    %v69 = vld [vmem:[%s2 + $0xf8] sm:$0xff]
    %v70 = vld [vmem:[%s2 + $0x100] sm:$0xff]
    %v71 = vld [vmem:[%s2 + $0x108] sm:$0xff]
    %v72 = vld [vmem:[%s2 + $0x110] sm:$0xff]
    %v73 = vld [vmem:[%s2 + $0x118] sm:$0xff]
    %v74 = vld [vmem:[%s2 + $0x120] sm:$0xff]
    %v75 = vld [vmem:[%s2 + $0x128] sm:$0xff]
    %v76 = vld [vmem:[%s2 + $0x130] sm:$0xff]
    %v77 = vld [vmem:[%s2 + $0x138] sm:$0xff]
    %v78 = vld [vmem:[%s2 + $0x140] sm:$0xff]
    %v79 = vld [vmem:[%s2 + $0x148] sm:$0xff]
    %v80 = vld [vmem:[%s2 + $0x150] sm:$0xff]
    %v81 = vld [vmem:[%s2 + $0x158] sm:$0xff]
    %v82 = vld [vmem:[%s2 + $0x160] sm:$0xff]
    %v83 = vld [vmem:[%s2 + $0x168] sm:$0xff]
    %v84 = vld [vmem:[%s2 + $0x170] sm:$0xff]
    %v85 = vld [vmem:[%s2 + $0x178] sm:$0xff]
    %v86 = vld [vmem:[%s2 + $0x180] sm:$0xff]
    %v87 = vld [vmem:[%s2 + $0x188] sm:$0xff]
    %v88 = vld [vmem:[%s2 + $0x190] sm:$0xff]
    %v89 = vld [vmem:[%s2 + $0x198] sm:$0xff]
    %v90 = vld [vmem:[%s2 + $0x1a0] sm:$0xff]
    %v91 = vld [vmem:[%s2 + $0x1a8] sm:$0xff]
    %v92 = vld [vmem:[%s2 + $0x1b0] sm:$0xff]
    %v93 = vld [vmem:[%s2 + $0x1b8] sm:$0xff]
    %v94 = vld [vmem:[%s2 + $0x1c0] sm:$0xff]
    %v95 = vld [vmem:[%s2 + $0x1c8] sm:$0xff]
    %v96 = vld [vmem:[%s2 + $0x1d0] sm:$0xff]
    %v97 = vld [vmem:[%s2 + $0x1d8] sm:$0xff]
    %v98 = vld [vmem:[%s2 + $0x1e0] sm:$0xff]
    %v99 = vld [vmem:[%s2 + $0x1e8] sm:$0xff]
    %v100 = vld [vmem:[%s2 + $0x1f0] sm:$0xff]
    %v101 = vld [vmem:[%s2 + $0x1f8] sm:$0xff]
    %v102 = vld [vmem:[%s2 + $0x200] sm:$0xff]
    %v103 = vld [vmem:[%s2 + $0x208] sm:$0xff]
    %v104 = vld [vmem:[%s2 + $0x210] sm:$0xff]
    %v105 = vld [vmem:[%s2 + $0x218] sm:$0xff]
    %v106 = vld [vmem:[%s2 + $0x220] sm:$0xff]
    %v107 = vld [vmem:[%s2 + $0x228] sm:$0xff]
    %v108 = vld [vmem:[%s2 + $0x230] sm:$0xff]
    %v109 = vld [vmem:[%s2 + $0x238] sm:$0xff]
    %v110 = vld [vmem:[%s2 + $0x240] sm:$0xff]
    %v111 = vld [vmem:[%s2 + $0x248] sm:$0xff]
    %v112 = vld [vmem:[%s2 + $0x250] sm:$0xff]
    %v113 = vld [vmem:[%s2 + $0x258] sm:$0xff]
    %v114 = vld [vmem:[%s2 + $0x260] sm:$0xff]
    %v115 = vld [vmem:[%s2 + $0x268] sm:$0xff]
    %v116 = vld [vmem:[%s2 + $0x270] sm:$0xff]
    %v117 = vld [vmem:[%s2 + $0x278] sm:$0xff]
    %v118 = vld [vmem:[%s2 + $0x280] sm:$0xff]
    %v119 = vld [vmem:[%s2 + $0x288] sm:$0xff]
    %v120 = vld [vmem:[%s2 + $0x290] sm:$0xff]
    %v121 = vld [vmem:[%s2 + $0x298] sm:$0xff]
    %v122 = vld [vmem:[%s2 + $0x2a0] sm:$0xff]
    %v123 = vld [vmem:[%s2 + $0x2a8] sm:$0xff]
    %v124 = vld [vmem:[%s2 + $0x2b0] sm:$0xff]
    %v125 = vld [vmem:[%s2 + $0x2b8] sm:$0xff]
    %v126 = vld [vmem:[%s2 + $0x2c0] sm:$0xff]
    %v127 = vld [vmem:[%s2 + $0x2c8] sm:$0xff]
    %v128 = vld [vmem:[%s2 + $0x2d0] sm:$0xff]
    %v129 = vld [vmem:[%s2 + $0x2d8] sm:$0xff]
    %v130 = vld [vmem:[%s2 + $0x2e0] sm:$0xff]
    %v131 = vld [vmem:[%s2 + $0x2e8] sm:$0xff]
    %v132 = vld [vmem:[%s2 + $0x2f0] sm:$0xff]
    %v133 = vld [vmem:[%s2 + $0x2f8] sm:$0xff]
    %v134 = vld [vmem:[%s3] sm:$0x1]
    %v136 = vlaneseq
    %v137 = vshrl.u32 %v136, 7
    %v138 = vsub.s32 0, %v137
    %v139 = vrot.slane %v134, %v138
    %v143 = vcombine.high %v36, %v36
    %v145 = vunpack.c.l.s4 1983009808
    %v146 = vunpack.c.0.s8 %v145
    %v147 = vlaneseq
    %v148 = vshrl.u32 %v147, 7
    %v149 = vsub.s32 %v146, %v148
    %v150 = vrot.slane %v36, %v149
    %v152 = vunpack.c.l.s4 1983009808
    %v153 = vunpack.c.0.s8 %v152
    %v154 = vlaneseq
    %v155 = vshrl.u32 %v154, 7
    %v156 = vsub.s32 %v153, %v155
    %v157 = vrot.slane %v143, %v156
    %v158 = vcombine.high %v150, %v150
    %v159 = vcombine.high %v157, %v157
    %v161 = vunpack.c.l.s4 1983009808
    %v162 = vunpack.c.0.s8 %v161
    %v163 = vlaneseq
    %v164 = vshrl.u32 %v163, 7
    %v165 = vsub.s32 %v162, %v164
    %v166 = vrot.slane %v37, %v165
    %v167 = vcombine.high %v166, %v166
    %174 = vmatprep.subr.mxu0 0.0
    %175 = vmatpush1.msra.mxu0 %v38
    %176 = vmatprep.subr.mxu0 0.0
    %177 = vmatpush1.msra.mxu0 %v39
    %178 = vmatprep.subr.mxu0 0.0
    %179 = vmatpush1.msra.mxu0 %v40
    %180 = vmatprep.subr.mxu0 0.0
    %181 = vmatpush1.msra.mxu0 %v41
    %182 = vmatprep.subr.mxu0 0.0
    %183 = vmatpush1.msra.mxu0 %v42
    %184 = vmatprep.subr.mxu0 0.0
    %185 = vmatpush1.msra.mxu0 %v43
    %186 = vmatprep.subr.mxu0 0.0
    %187 = vmatpush1.msra.mxu0 %v44
    %188 = vmatprep.subr.mxu0 0.0
    %189 = vmatpush1.msra.mxu0 %v45
    %190 = vmatprep.subr.mxu0 0.0
    %191 = vmatpush1.msra.mxu0 %v46
    %192 = vmatprep.subr.mxu0 0.0
    %193 = vmatpush1.msra.mxu0 %v47
    %194 = vmatprep.subr.mxu0 0.0
    %195 = vmatpush1.msra.mxu0 %v48
    %196 = vmatprep.subr.mxu0 0.0
    %197 = vmatpush1.msra.mxu0 %v49
    %198 = vmatprep.subr.mxu0 0.0
    %199 = vmatpush1.msra.mxu0 %v50
    %200 = vmatprep.subr.mxu0 0.0
    %201 = vmatpush1.msra.mxu0 %v51
    %202 = vmatprep.subr.mxu0 0.0
    %203 = vmatpush1.msra.mxu0 %v52
    %204 = vmatprep.subr.mxu0 0.0
    %205 = vmatpush1.msra.mxu0 %v53
    %206 = vmatprep.subr.mxu0 0.0
    %207 = vmatpush1.msra.mxu0 %v54
    %208 = vmatprep.subr.mxu0 0.0
    %209 = vmatpush1.msra.mxu0 %v55
    %210 = vmatprep.subr.mxu0 0.0
    %211 = vmatpush1.msra.mxu0 %v56
    %212 = vmatprep.subr.mxu0 0.0
    %213 = vmatpush1.msra.mxu0 %v57
    %214 = vmatprep.subr.mxu0 0.0
    %215 = vmatpush1.msra.mxu0 %v58
    %216 = vmatprep.subr.mxu0 0.0
    %217 = vmatpush1.msra.mxu0 %v59
    %218 = vmatprep.subr.mxu0 0.0
    %219 = vmatpush1.msra.mxu0 %v60
    %220 = vmatprep.subr.mxu0 0.0
    %221 = vmatpush1.msra.mxu0 %v61
    %222 = vmatprep.subr.mxu0 0.0
    %223 = vmatpush1.msra.mxu0 %v62
    %224 = vmatprep.subr.mxu0 0.0
    %225 = vmatpush1.msra.mxu0 %v63
    %226 = vmatprep.subr.mxu0 0.0
    %227 = vmatpush1.msra.mxu0 %v64
    %228 = vmatprep.subr.mxu0 0.0
    %229 = vmatpush1.msra.mxu0 %v65
    %230 = vmatprep.subr.mxu0 0.0
    %231 = vmatpush1.msra.mxu0 %v66
    %232 = vmatprep.subr.mxu0 0.0
    %233 = vmatpush1.msra.mxu0 %v67
    %234 = vmatprep.subr.mxu0 0.0
    %235 = vmatpush1.msra.mxu0 %v68
    %236 = vmatprep.subr.mxu0 0.0
    %237 = vmatpush1.msra.mxu0 %v69
    %238 = vmatprep.mubr.f32.mxu0 %v158
    %239 = vmatmul.mubr.f32.gmra.mrb[0].mxu0 %v150
    %v240 = vpop.f32.mrb[0].mxu0
    %v241 = vadd.f32 %v139, %v240
    %v242 = vpop.f32.mrb[0].mxu0
    %243 = vdwg.mxu0
    %244 = vmatprep.subr.mxu0 0.0
    %245 = vmatpush1.msra.mxu0 %v70
    %246 = vmatprep.subr.mxu0 0.0
    %247 = vmatpush1.msra.mxu0 %v71
    %248 = vmatprep.subr.mxu0 0.0
    %249 = vmatpush1.msra.mxu0 %v72
    %250 = vmatprep.subr.mxu0 0.0
    %251 = vmatpush1.msra.mxu0 %v73
    %252 = vmatprep.subr.mxu0 0.0
    %253 = vmatpush1.msra.mxu0 %v74
    %254 = vmatprep.subr.mxu0 0.0
    %255 = vmatpush1.msra.mxu0 %v75
    %256 = vmatprep.subr.mxu0 0.0
    %257 = vmatpush1.msra.mxu0 %v76
    %258 = vmatprep.subr.mxu0 0.0
    %259 = vmatpush1.msra.mxu0 %v77
    %260 = vmatprep.subr.mxu0 0.0
    %261 = vmatpush1.msra.mxu0 %v78
    %262 = vmatprep.subr.mxu0 0.0
    %263 = vmatpush1.msra.mxu0 %v79
    %264 = vmatprep.subr.mxu0 0.0
    %265 = vmatpush1.msra.mxu0 %v80
    %266 = vmatprep.subr.mxu0 0.0
    %267 = vmatpush1.msra.mxu0 %v81
    %268 = vmatprep.subr.mxu0 0.0
    %269 = vmatpush1.msra.mxu0 %v82
    %270 = vmatprep.subr.mxu0 0.0
    %271 = vmatpush1.msra.mxu0 %v83
    %272 = vmatprep.subr.mxu0 0.0
    %273 = vmatpush1.msra.mxu0 %v84
    %274 = vmatprep.subr.mxu0 0.0
    %275 = vmatpush1.msra.mxu0 %v85
    %276 = vmatprep.subr.mxu0 0.0
    %277 = vmatpush1.msra.mxu0 %v86
    %278 = vmatprep.subr.mxu0 0.0
    %279 = vmatpush1.msra.mxu0 %v87
    %280 = vmatprep.subr.mxu0 0.0
    %281 = vmatpush1.msra.mxu0 %v88
    %282 = vmatprep.subr.mxu0 0.0
    %283 = vmatpush1.msra.mxu0 %v89
    %284 = vmatprep.subr.mxu0 0.0
    %285 = vmatpush1.msra.mxu0 %v90
    %286 = vmatprep.subr.mxu0 0.0
    %287 = vmatpush1.msra.mxu0 %v91
    %288 = vmatprep.subr.mxu0 0.0
    %289 = vmatpush1.msra.mxu0 %v92
    %290 = vmatprep.subr.mxu0 0.0
    %291 = vmatpush1.msra.mxu0 %v93
    %292 = vmatprep.subr.mxu0 0.0
    %293 = vmatpush1.msra.mxu0 %v94
    %294 = vmatprep.subr.mxu0 0.0
    %295 = vmatpush1.msra.mxu0 %v95
    %296 = vmatprep.subr.mxu0 0.0
    %297 = vmatpush1.msra.mxu0 %v96
    %298 = vmatprep.subr.mxu0 0.0
    %299 = vmatpush1.msra.mxu0 %v97
    %300 = vmatprep.subr.mxu0 0.0
    %301 = vmatpush1.msra.mxu0 %v98
    %302 = vmatprep.subr.mxu0 0.0
    %303 = vmatpush1.msra.mxu0 %v99
    %304 = vmatprep.subr.mxu0 0.0
    %305 = vmatpush1.msra.mxu0 %v100
    %306 = vmatprep.subr.mxu0 0.0
    %307 = vmatpush1.msra.mxu0 %v101
    %308 = vmatprep.mubr.f32.mxu0 %v159
    %309 = vmatmul.mubr.f32.gmra.mrb[0].mxu0 %v157
    %v310 = vpop.f32.mrb[0].mxu0
    %v311 = vadd.f32 %v241, %v310
    %v312 = vpop.f32.mrb[0].mxu0
    %313 = vdwg.mxu0
    %314 = vmatprep.subr.mxu0 0.0
    %315 = vmatpush1.msra.mxu0 %v102
    %316 = vmatprep.subr.mxu0 0.0
    %317 = vmatpush1.msra.mxu0 %v103
    %318 = vmatprep.subr.mxu0 0.0
    %319 = vmatpush1.msra.mxu0 %v104
    %320 = vmatprep.subr.mxu0 0.0
    %321 = vmatpush1.msra.mxu0 %v105
    %322 = vmatprep.subr.mxu0 0.0
    %323 = vmatpush1.msra.mxu0 %v106
    %324 = vmatprep.subr.mxu0 0.0
    %325 = vmatpush1.msra.mxu0 %v107
    %326 = vmatprep.subr.mxu0 0.0
    %327 = vmatpush1.msra.mxu0 %v108
    %328 = vmatprep.subr.mxu0 0.0
    %329 = vmatpush1.msra.mxu0 %v109
    %330 = vmatprep.subr.mxu0 0.0
    %331 = vmatpush1.msra.mxu0 %v110
    %332 = vmatprep.subr.mxu0 0.0
    %333 = vmatpush1.msra.mxu0 %v111
    %334 = vmatprep.subr.mxu0 0.0
    %335 = vmatpush1.msra.mxu0 %v112
    %336 = vmatprep.subr.mxu0 0.0
    %337 = vmatpush1.msra.mxu0 %v113
    %338 = vmatprep.subr.mxu0 0.0
    %339 = vmatpush1.msra.mxu0 %v114
    %340 = vmatprep.subr.mxu0 0.0
    %341 = vmatpush1.msra.mxu0 %v115
    %342 = vmatprep.subr.mxu0 0.0
    %343 = vmatpush1.msra.mxu0 %v116
    %344 = vmatprep.subr.mxu0 0.0
    %345 = vmatpush1.msra.mxu0 %v117
    %346 = vmatprep.subr.mxu0 0.0
    %347 = vmatpush1.msra.mxu0 %v118
    %348 = vmatprep.subr.mxu0 0.0
    %349 = vmatpush1.msra.mxu0 %v119
    %350 = vmatprep.subr.mxu0 0.0
    %351 = vmatpush1.msra.mxu0 %v120
    %352 = vmatprep.subr.mxu0 0.0
    %353 = vmatpush1.msra.mxu0 %v121
    %354 = vmatprep.subr.mxu0 0.0
    %355 = vmatpush1.msra.mxu0 %v122
    %356 = vmatprep.subr.mxu0 0.0
    %357 = vmatpush1.msra.mxu0 %v123
    %358 = vmatprep.subr.mxu0 0.0
    %359 = vmatpush1.msra.mxu0 %v124
    %360 = vmatprep.subr.mxu0 0.0
    %361 = vmatpush1.msra.mxu0 %v125
    %362 = vmatprep.subr.mxu0 0.0
    %363 = vmatpush1.msra.mxu0 %v126
    %364 = vmatprep.subr.mxu0 0.0
    %365 = vmatpush1.msra.mxu0 %v127
    %366 = vmatprep.subr.mxu0 0.0
    %367 = vmatpush1.msra.mxu0 %v128
    %368 = vmatprep.subr.mxu0 0.0
    %369 = vmatpush1.msra.mxu0 %v129
    %370 = vmatprep.subr.mxu0 0.0
    %371 = vmatpush1.msra.mxu0 %v130
    %372 = vmatprep.subr.mxu0 0.0
    %373 = vmatpush1.msra.mxu0 %v131
    %374 = vmatprep.subr.mxu0 0.0
    %375 = vmatpush1.msra.mxu0 %v132
    %376 = vmatprep.subr.mxu0 0.0
    %377 = vmatpush1.msra.mxu0 %v133
    %378 = vmatprep.mubr.f32.mxu0 %v167
    %379 = vmatmul.mubr.f32.gmra.mrb[0].mxu0 %v166
    %v380 = vpop.f32.mrb[0].mxu0
    %v381 = vadd.f32 %v311, %v380
    %v382 = vpop.f32.mrb[0].mxu0
    %383 = vdwg.mxu0
    %v384 = vmax.f32 %v381, 0.0
    %v385 = vand.u32 2147483647, %v381
    %v386 = vsub.f32 0.0, %v385
    %v387 = vmul.f32 %v386, 1.442695
    %v388 = vpow.pop %v387
    %v389 = vadd.f32 %v388, 1.0
    %v390 = vlog2.pop %v389
    %v391 = vmul.f32 %v390, 0.6931472
    %v392 = vmul.f32 -0.5, %v388
    %v393 = vadd.f32 %v392, 1.0
    %v394 = vmul.f32 %v393, %v388
    %v395 = vand.u32 2147483647, %v388
    %vm396 = vcmp.lt.f32.partialorder %v395, 0.0004427343
    %v397 = vsel %vm396, %v394, %v391
    %v398 = vadd.f32 %v384, %v397
    %v399 = vmax.f32 %v26, 0.0
    %v400 = vmax.f32 %v27, 0.0
    %v401 = vld [vmem:[%s4] sm:$0xff]
    %v402 = vld [vmem:[%s4 + $0x8] sm:$0xff]
    %v403 = vld [vmem:[%s4 + $0x10] sm:$0xff]
    %v404 = vld [vmem:[%s4 + $0x18] sm:$0xff]
    %v405 = vld [vmem:[%s4 + $0x20] sm:$0xff]
    %v406 = vld [vmem:[%s4 + $0x28] sm:$0xff]
    %v407 = vld [vmem:[%s4 + $0x30] sm:$0xff]
    %v408 = vld [vmem:[%s4 + $0x38] sm:$0xff]
    %v409 = vld [vmem:[%s4 + $0x40] sm:$0xff]
    %v410 = vld [vmem:[%s4 + $0x48] sm:$0xff]
    %v411 = vld [vmem:[%s4 + $0x50] sm:$0xff]
    %v412 = vld [vmem:[%s4 + $0x58] sm:$0xff]
    %v413 = vld [vmem:[%s4 + $0x60] sm:$0xff]
    %v414 = vld [vmem:[%s4 + $0x68] sm:$0xff]
    %v415 = vld [vmem:[%s4 + $0x70] sm:$0xff]
    %v416 = vld [vmem:[%s4 + $0x78] sm:$0xff]
    %v417 = vld [vmem:[%s4 + $0x80] sm:$0xff]
    %v418 = vld [vmem:[%s4 + $0x88] sm:$0xff]
    %v419 = vld [vmem:[%s4 + $0x90] sm:$0xff]
    %v420 = vld [vmem:[%s4 + $0x98] sm:$0xff]
    %v421 = vld [vmem:[%s4 + $0xa0] sm:$0xff]
    %v422 = vld [vmem:[%s4 + $0xa8] sm:$0xff]
    %v423 = vld [vmem:[%s4 + $0xb0] sm:$0xff]
    %v424 = vld [vmem:[%s4 + $0xb8] sm:$0xff]
    %v425 = vld [vmem:[%s4 + $0xc0] sm:$0xff]
    %v426 = vld [vmem:[%s4 + $0xc8] sm:$0xff]
    %v427 = vld [vmem:[%s4 + $0xd0] sm:$0xff]
    %v428 = vld [vmem:[%s4 + $0xd8] sm:$0xff]
    %v429 = vld [vmem:[%s4 + $0xe0] sm:$0xff]
    %v430 = vld [vmem:[%s4 + $0xe8] sm:$0xff]
    %v431 = vld [vmem:[%s4 + $0xf0] sm:$0xff]
    %v432 = vld [vmem:[%s4 + $0xf8] sm:$0xff]
    %v433 = vld [vmem:[%s4 + $0x100] sm:$0xff]
    %v434 = vld [vmem:[%s4 + $0x108] sm:$0xff]
    %v435 = vld [vmem:[%s4 + $0x110] sm:$0xff]
    %v436 = vld [vmem:[%s4 + $0x118] sm:$0xff]
    %v437 = vld [vmem:[%s4 + $0x120] sm:$0xff]
    %v438 = vld [vmem:[%s4 + $0x128] sm:$0xff]
    %v439 = vld [vmem:[%s4 + $0x130] sm:$0xff]
    %v440 = vld [vmem:[%s4 + $0x138] sm:$0xff]
    %v441 = vld [vmem:[%s4 + $0x140] sm:$0xff]
    %v442 = vld [vmem:[%s4 + $0x148] sm:$0xff]
    %v443 = vld [vmem:[%s4 + $0x150] sm:$0xff]
    %v444 = vld [vmem:[%s4 + $0x158] sm:$0xff]
    %v445 = vld [vmem:[%s4 + $0x160] sm:$0xff]
    %v446 = vld [vmem:[%s4 + $0x168] sm:$0xff]
    %v447 = vld [vmem:[%s4 + $0x170] sm:$0xff]
    %v448 = vld [vmem:[%s4 + $0x178] sm:$0xff]
    %v449 = vld [vmem:[%s4 + $0x180] sm:$0xff]
    %v450 = vld [vmem:[%s4 + $0x188] sm:$0xff]
    %v451 = vld [vmem:[%s4 + $0x190] sm:$0xff]
    %v452 = vld [vmem:[%s4 + $0x198] sm:$0xff]
    %v453 = vld [vmem:[%s4 + $0x1a0] sm:$0xff]
    %v454 = vld [vmem:[%s4 + $0x1a8] sm:$0xff]
    %v455 = vld [vmem:[%s4 + $0x1b0] sm:$0xff]
    %v456 = vld [vmem:[%s4 + $0x1b8] sm:$0xff]
    %v457 = vld [vmem:[%s4 + $0x1c0] sm:$0xff]
    %v458 = vld [vmem:[%s4 + $0x1c8] sm:$0xff]
    %v459 = vld [vmem:[%s4 + $0x1d0] sm:$0xff]
    %v460 = vld [vmem:[%s4 + $0x1d8] sm:$0xff]
    %v461 = vld [vmem:[%s4 + $0x1e0] sm:$0xff]
    %v462 = vld [vmem:[%s4 + $0x1e8] sm:$0xff]
    %v463 = vld [vmem:[%s4 + $0x1f0] sm:$0xff]
    %v464 = vld [vmem:[%s4 + $0x1f8] sm:$0xff]
    %v465 = vld [vmem:[%s4 + $0x200] sm:$0xff]
    %v466 = vld [vmem:[%s4 + $0x208] sm:$0xff]
    %v467 = vld [vmem:[%s4 + $0x210] sm:$0xff]
    %v468 = vld [vmem:[%s4 + $0x218] sm:$0xff]
    %v469 = vld [vmem:[%s4 + $0x220] sm:$0xff]
    %v470 = vld [vmem:[%s4 + $0x228] sm:$0xff]
    %v471 = vld [vmem:[%s4 + $0x230] sm:$0xff]
    %v472 = vld [vmem:[%s4 + $0x238] sm:$0xff]
    %v473 = vld [vmem:[%s4 + $0x240] sm:$0xff]
    %v474 = vld [vmem:[%s4 + $0x248] sm:$0xff]
    %v475 = vld [vmem:[%s4 + $0x250] sm:$0xff]
    %v476 = vld [vmem:[%s4 + $0x258] sm:$0xff]
    %v477 = vld [vmem:[%s4 + $0x260] sm:$0xff]
    %v478 = vld [vmem:[%s4 + $0x268] sm:$0xff]
    %v479 = vld [vmem:[%s4 + $0x270] sm:$0xff]
    %v480 = vld [vmem:[%s4 + $0x278] sm:$0xff]
    %v481 = vld [vmem:[%s4 + $0x280] sm:$0xff]
    %v482 = vld [vmem:[%s4 + $0x288] sm:$0xff]
    %v483 = vld [vmem:[%s4 + $0x290] sm:$0xff]
    %v484 = vld [vmem:[%s4 + $0x298] sm:$0xff]
    %v485 = vld [vmem:[%s4 + $0x2a0] sm:$0xff]
    %v486 = vld [vmem:[%s4 + $0x2a8] sm:$0xff]
    %v487 = vld [vmem:[%s4 + $0x2b0] sm:$0xff]
    %v488 = vld [vmem:[%s4 + $0x2b8] sm:$0xff]
    %v489 = vld [vmem:[%s4 + $0x2c0] sm:$0xff]
    %v490 = vld [vmem:[%s4 + $0x2c8] sm:$0xff]
    %v491 = vld [vmem:[%s4 + $0x2d0] sm:$0xff]
    %v492 = vld [vmem:[%s4 + $0x2d8] sm:$0xff]
    %v493 = vld [vmem:[%s4 + $0x2e0] sm:$0xff]
    %v494 = vld [vmem:[%s4 + $0x2e8] sm:$0xff]
    %v495 = vld [vmem:[%s4 + $0x2f0] sm:$0xff]
    %v496 = vld [vmem:[%s4 + $0x2f8] sm:$0xff]
    %v497 = vld [vmem:[%s4 + $0x300] sm:$0xff]
    %v498 = vld [vmem:[%s4 + $0x308] sm:$0xff]
    %v499 = vld [vmem:[%s4 + $0x310] sm:$0xff]
    %v500 = vld [vmem:[%s4 + $0x318] sm:$0xff]
    %v501 = vld [vmem:[%s4 + $0x320] sm:$0xff]
    %v502 = vld [vmem:[%s4 + $0x328] sm:$0xff]
    %v503 = vld [vmem:[%s4 + $0x330] sm:$0xff]
    %v504 = vld [vmem:[%s4 + $0x338] sm:$0xff]
    %v505 = vld [vmem:[%s4 + $0x340] sm:$0xff]
    %v506 = vld [vmem:[%s4 + $0x348] sm:$0xff]
    %v507 = vld [vmem:[%s4 + $0x350] sm:$0xff]
    %v508 = vld [vmem:[%s4 + $0x358] sm:$0xff]
    %v509 = vld [vmem:[%s4 + $0x360] sm:$0xff]
    %v510 = vld [vmem:[%s4 + $0x368] sm:$0xff]
    %v511 = vld [vmem:[%s4 + $0x370] sm:$0xff]
    %v512 = vld [vmem:[%s4 + $0x378] sm:$0xff]
    %v513 = vld [vmem:[%s4 + $0x380] sm:$0xff]
    %v514 = vld [vmem:[%s4 + $0x388] sm:$0xff]
    %v515 = vld [vmem:[%s4 + $0x390] sm:$0xff]
    %v516 = vld [vmem:[%s4 + $0x398] sm:$0xff]
    %v517 = vld [vmem:[%s4 + $0x3a0] sm:$0xff]
    %v518 = vld [vmem:[%s4 + $0x3a8] sm:$0xff]
    %v519 = vld [vmem:[%s4 + $0x3b0] sm:$0xff]
    %v520 = vld [vmem:[%s4 + $0x3b8] sm:$0xff]
    %v521 = vld [vmem:[%s4 + $0x3c0] sm:$0xff]
    %v522 = vld [vmem:[%s4 + $0x3c8] sm:$0xff]
    %v523 = vld [vmem:[%s4 + $0x3d0] sm:$0xff]
    %v524 = vld [vmem:[%s4 + $0x3d8] sm:$0xff]
    %v525 = vld [vmem:[%s4 + $0x3e0] sm:$0xff]
    %v526 = vld [vmem:[%s5] sm:$0x1]
    %v528 = vlaneseq
    %v529 = vshrl.u32 %v528, 7
    %v530 = vsub.s32 0, %v529
    %v531 = vrot.slane %v526, %v530
    %v535 = vcombine.high %v399, %v399
    %v537 = vunpack.c.l.s4 1983009808
    %v538 = vunpack.c.0.s8 %v537
    %v539 = vlaneseq
    %v540 = vshrl.u32 %v539, 7
    %v541 = vsub.s32 %v538, %v540
    %v542 = vrot.slane %v399, %v541
    %v544 = vunpack.c.l.s4 1983009808
    %v545 = vunpack.c.0.s8 %v544
    %v546 = vlaneseq
    %v547 = vshrl.u32 %v546, 7
    %v548 = vsub.s32 %v545, %v547
    %v549 = vrot.slane %v535, %v548
    %v550 = vcombine.high %v542, %v542
    %v551 = vcombine.high %v549, %v549
    %v552 = vcombine.high %v400, %v400
    %v554 = vunpack.c.l.s4 1983009808
    %v555 = vunpack.c.0.s8 %v554
    %v556 = vlaneseq
    %v557 = vshrl.u32 %v556, 7
    %v558 = vsub.s32 %v555, %v557
    %v559 = vrot.slane %v400, %v558
    %v561 = vunpack.c.l.s4 1983009808
    %v562 = vunpack.c.0.s8 %v561
    %v563 = vlaneseq
    %v564 = vshrl.u32 %v563, 7
    %v565 = vsub.s32 %v562, %v564
    %v566 = vrot.slane %v552, %v565
    %v567 = vcombine.high %v559, %v559
    %v568 = vcombine.high %v566, %v566
    %vm576 = vcmask 850944
    %v577 = vsel %vm576, %v568, 0
    %579 = vmatprep.subr.mxu0 0.0
    %580 = vmatpush1.msra.mxu0 %v401
    %581 = vmatprep.subr.mxu0 0.0
    %582 = vmatpush1.msra.mxu0 %v402
    %583 = vmatprep.subr.mxu0 0.0
    %584 = vmatpush1.msra.mxu0 %v403
    %585 = vmatprep.subr.mxu0 0.0
    %586 = vmatpush1.msra.mxu0 %v404
    %587 = vmatprep.subr.mxu0 0.0
    %588 = vmatpush1.msra.mxu0 %v405
    %589 = vmatprep.subr.mxu0 0.0
    %590 = vmatpush1.msra.mxu0 %v406
    %591 = vmatprep.subr.mxu0 0.0
    %592 = vmatpush1.msra.mxu0 %v407
    %593 = vmatprep.subr.mxu0 0.0
    %594 = vmatpush1.msra.mxu0 %v408
    %595 = vmatprep.subr.mxu0 0.0
    %596 = vmatpush1.msra.mxu0 %v409
    %597 = vmatprep.subr.mxu0 0.0
    %598 = vmatpush1.msra.mxu0 %v410
    %599 = vmatprep.subr.mxu0 0.0
    %600 = vmatpush1.msra.mxu0 %v411
    %601 = vmatprep.subr.mxu0 0.0
    %602 = vmatpush1.msra.mxu0 %v412
    %603 = vmatprep.subr.mxu0 0.0
    %604 = vmatpush1.msra.mxu0 %v413
    %605 = vmatprep.subr.mxu0 0.0
    %606 = vmatpush1.msra.mxu0 %v414
    %607 = vmatprep.subr.mxu0 0.0
    %608 = vmatpush1.msra.mxu0 %v415
    %609 = vmatprep.subr.mxu0 0.0
    %610 = vmatpush1.msra.mxu0 %v416
    %611 = vmatprep.subr.mxu0 0.0
    %612 = vmatpush1.msra.mxu0 %v417
    %613 = vmatprep.subr.mxu0 0.0
    %614 = vmatpush1.msra.mxu0 %v418
    %615 = vmatprep.subr.mxu0 0.0
    %616 = vmatpush1.msra.mxu0 %v419
    %617 = vmatprep.subr.mxu0 0.0
    %618 = vmatpush1.msra.mxu0 %v420
    %619 = vmatprep.subr.mxu0 0.0
    %620 = vmatpush1.msra.mxu0 %v421
    %621 = vmatprep.subr.mxu0 0.0
    %622 = vmatpush1.msra.mxu0 %v422
    %623 = vmatprep.subr.mxu0 0.0
    %624 = vmatpush1.msra.mxu0 %v423
    %625 = vmatprep.subr.mxu0 0.0
    %626 = vmatpush1.msra.mxu0 %v424
    %627 = vmatprep.subr.mxu0 0.0
    %628 = vmatpush1.msra.mxu0 %v425
    %629 = vmatprep.subr.mxu0 0.0
    %630 = vmatpush1.msra.mxu0 %v426
    %631 = vmatprep.subr.mxu0 0.0
    %632 = vmatpush1.msra.mxu0 %v427
    %633 = vmatprep.subr.mxu0 0.0
    %634 = vmatpush1.msra.mxu0 %v428
    %635 = vmatprep.subr.mxu0 0.0
    %636 = vmatpush1.msra.mxu0 %v429
    %637 = vmatprep.subr.mxu0 0.0
    %638 = vmatpush1.msra.mxu0 %v430
    %639 = vmatprep.subr.mxu0 0.0
    %640 = vmatpush1.msra.mxu0 %v431
    %641 = vmatprep.subr.mxu0 0.0
    %642 = vmatpush1.msra.mxu0 %v432
    %643 = vmatprep.mubr.f32.mxu0 %v550
    %644 = vmatmul.mubr.f32.gmra.mrb[0].mxu0 %v542
    %v645 = vpop.f32.mrb[0].mxu0
    %v646 = vadd.f32 %v531, %v645
    %v647 = vpop.f32.mrb[0].mxu0
    %648 = vdwg.mxu0
    %649 = vmatprep.subr.mxu0 0.0
    %650 = vmatpush1.msra.mxu0 %v433
    %651 = vmatprep.subr.mxu0 0.0
    %652 = vmatpush1.msra.mxu0 %v434
    %653 = vmatprep.subr.mxu0 0.0
    %654 = vmatpush1.msra.mxu0 %v435
    %655 = vmatprep.subr.mxu0 0.0
    %656 = vmatpush1.msra.mxu0 %v436
    %657 = vmatprep.subr.mxu0 0.0
    %658 = vmatpush1.msra.mxu0 %v437
    %659 = vmatprep.subr.mxu0 0.0
    %660 = vmatpush1.msra.mxu0 %v438
    %661 = vmatprep.subr.mxu0 0.0
    %662 = vmatpush1.msra.mxu0 %v439
    %663 = vmatprep.subr.mxu0 0.0
    %664 = vmatpush1.msra.mxu0 %v440
    %665 = vmatprep.subr.mxu0 0.0
    %666 = vmatpush1.msra.mxu0 %v441
    %667 = vmatprep.subr.mxu0 0.0
    %668 = vmatpush1.msra.mxu0 %v442
    %669 = vmatprep.subr.mxu0 0.0
    %670 = vmatpush1.msra.mxu0 %v443
    %671 = vmatprep.subr.mxu0 0.0
    %672 = vmatpush1.msra.mxu0 %v444
    %673 = vmatprep.subr.mxu0 0.0
    %674 = vmatpush1.msra.mxu0 %v445
    %675 = vmatprep.subr.mxu0 0.0
    %676 = vmatpush1.msra.mxu0 %v446
    %677 = vmatprep.subr.mxu0 0.0
    %678 = vmatpush1.msra.mxu0 %v447
    %679 = vmatprep.subr.mxu0 0.0
    %680 = vmatpush1.msra.mxu0 %v448
    %681 = vmatprep.subr.mxu0 0.0
    %682 = vmatpush1.msra.mxu0 %v449
    %683 = vmatprep.subr.mxu0 0.0
    %684 = vmatpush1.msra.mxu0 %v450
    %685 = vmatprep.subr.mxu0 0.0
    %686 = vmatpush1.msra.mxu0 %v451
    %687 = vmatprep.subr.mxu0 0.0
    %688 = vmatpush1.msra.mxu0 %v452
    %689 = vmatprep.subr.mxu0 0.0
    %690 = vmatpush1.msra.mxu0 %v453
    %691 = vmatprep.subr.mxu0 0.0
    %692 = vmatpush1.msra.mxu0 %v454
    %693 = vmatprep.subr.mxu0 0.0
    %694 = vmatpush1.msra.mxu0 %v455
    %695 = vmatprep.subr.mxu0 0.0
    %696 = vmatpush1.msra.mxu0 %v456
    %697 = vmatprep.subr.mxu0 0.0
    %698 = vmatpush1.msra.mxu0 %v457
    %699 = vmatprep.subr.mxu0 0.0
    %700 = vmatpush1.msra.mxu0 %v458
    %701 = vmatprep.subr.mxu0 0.0
    %702 = vmatpush1.msra.mxu0 %v459
    %703 = vmatprep.subr.mxu0 0.0
    %704 = vmatpush1.msra.mxu0 %v460
    %705 = vmatprep.subr.mxu0 0.0
    %706 = vmatpush1.msra.mxu0 %v461
    %707 = vmatprep.subr.mxu0 0.0
    %708 = vmatpush1.msra.mxu0 %v462
    %709 = vmatprep.subr.mxu0 0.0
    %710 = vmatpush1.msra.mxu0 %v463
    %711 = vmatprep.subr.mxu0 0.0
    %712 = vmatpush1.msra.mxu0 %v464
    %713 = vmatprep.mubr.f32.mxu0 %v551
    %714 = vmatmul.mubr.f32.gmra.mrb[0].mxu0 %v549
    %v715 = vpop.f32.mrb[0].mxu0
    %v716 = vadd.f32 %v646, %v715
    %v717 = vpop.f32.mrb[0].mxu0
    %718 = vdwg.mxu0
    %719 = vmatprep.subr.mxu0 0.0
    %720 = vmatpush1.msra.mxu0 %v465
    %721 = vmatprep.subr.mxu0 0.0
    %722 = vmatpush1.msra.mxu0 %v466
    %723 = vmatprep.subr.mxu0 0.0
    %724 = vmatpush1.msra.mxu0 %v467
    %725 = vmatprep.subr.mxu0 0.0
    %726 = vmatpush1.msra.mxu0 %v468
    %727 = vmatprep.subr.mxu0 0.0
    %728 = vmatpush1.msra.mxu0 %v469
    %729 = vmatprep.subr.mxu0 0.0
    %730 = vmatpush1.msra.mxu0 %v470
    %731 = vmatprep.subr.mxu0 0.0
    %732 = vmatpush1.msra.mxu0 %v471
    %733 = vmatprep.subr.mxu0 0.0
    %734 = vmatpush1.msra.mxu0 %v472
    %735 = vmatprep.subr.mxu0 0.0
    %736 = vmatpush1.msra.mxu0 %v473
    %737 = vmatprep.subr.mxu0 0.0
    %738 = vmatpush1.msra.mxu0 %v474
    %739 = vmatprep.subr.mxu0 0.0
    %740 = vmatpush1.msra.mxu0 %v475
    %741 = vmatprep.subr.mxu0 0.0
    %742 = vmatpush1.msra.mxu0 %v476
    %743 = vmatprep.subr.mxu0 0.0
    %744 = vmatpush1.msra.mxu0 %v477
    %745 = vmatprep.subr.mxu0 0.0
    %746 = vmatpush1.msra.mxu0 %v478
    %747 = vmatprep.subr.mxu0 0.0
    %748 = vmatpush1.msra.mxu0 %v479
    %749 = vmatprep.subr.mxu0 0.0
    %750 = vmatpush1.msra.mxu0 %v480
    %751 = vmatprep.subr.mxu0 0.0
    %752 = vmatpush1.msra.mxu0 %v481
    %753 = vmatprep.subr.mxu0 0.0
    %754 = vmatpush1.msra.mxu0 %v482
    %755 = vmatprep.subr.mxu0 0.0
    %756 = vmatpush1.msra.mxu0 %v483
    %757 = vmatprep.subr.mxu0 0.0
    %758 = vmatpush1.msra.mxu0 %v484
    %759 = vmatprep.subr.mxu0 0.0
    %760 = vmatpush1.msra.mxu0 %v485
    %761 = vmatprep.subr.mxu0 0.0
    %762 = vmatpush1.msra.mxu0 %v486
    %763 = vmatprep.subr.mxu0 0.0
    %764 = vmatpush1.msra.mxu0 %v487
    %765 = vmatprep.subr.mxu0 0.0
    %766 = vmatpush1.msra.mxu0 %v488
    %767 = vmatprep.subr.mxu0 0.0
    %768 = vmatpush1.msra.mxu0 %v489
    %769 = vmatprep.subr.mxu0 0.0
    %770 = vmatpush1.msra.mxu0 %v490
    %771 = vmatprep.subr.mxu0 0.0
    %772 = vmatpush1.msra.mxu0 %v491
    %773 = vmatprep.subr.mxu0 0.0
    %774 = vmatpush1.msra.mxu0 %v492
    %775 = vmatprep.subr.mxu0 0.0
    %776 = vmatpush1.msra.mxu0 %v493
    %777 = vmatprep.subr.mxu0 0.0
    %778 = vmatpush1.msra.mxu0 %v494
    %779 = vmatprep.subr.mxu0 0.0
    %780 = vmatpush1.msra.mxu0 %v495
    %781 = vmatprep.subr.mxu0 0.0
    %782 = vmatpush1.msra.mxu0 %v496
    %783 = vmatprep.mubr.f32.mxu0 %v567
    %784 = vmatmul.mubr.f32.gmra.mrb[0].mxu0 %v559
    %v785 = vpop.f32.mrb[0].mxu0
    %v786 = vadd.f32 %v716, %v785
    %v787 = vpop.f32.mrb[0].mxu0
    %788 = vdwg.mxu0
    %789 = vmatprep.subr.mxu0 0.0
    %790 = vmatpush1.msra.mxu0 %v497
    %791 = vmatprep.subr.mxu0 0.0
    %792 = vmatpush1.msra.mxu0 %v498
    %793 = vmatprep.subr.mxu0 0.0
    %794 = vmatpush1.msra.mxu0 %v499
    %795 = vmatprep.subr.mxu0 0.0
    %796 = vmatpush1.msra.mxu0 %v500
    %797 = vmatprep.subr.mxu0 0.0
    %798 = vmatpush1.msra.mxu0 %v501
    %799 = vmatprep.subr.mxu0 0.0
    %800 = vmatpush1.msra.mxu0 %v502
    %801 = vmatprep.subr.mxu0 0.0
    %802 = vmatpush1.msra.mxu0 %v503
    %803 = vmatprep.subr.mxu0 0.0
    %804 = vmatpush1.msra.mxu0 %v504
    %805 = vmatprep.subr.mxu0 0.0
    %806 = vmatpush1.msra.mxu0 %v505
    %807 = vmatprep.subr.mxu0 0.0
    %808 = vmatpush1.msra.mxu0 %v506
    %809 = vmatprep.subr.mxu0 0.0
    %810 = vmatpush1.msra.mxu0 %v507
    %811 = vmatprep.subr.mxu0 0.0
    %812 = vmatpush1.msra.mxu0 %v508
    %813 = vmatprep.subr.mxu0 0.0
    %814 = vmatpush1.msra.mxu0 %v509
    %815 = vmatprep.subr.mxu0 0.0
    %816 = vmatpush1.msra.mxu0 %v510
    %817 = vmatprep.subr.mxu0 0.0
    %818 = vmatpush1.msra.mxu0 %v511
    %819 = vmatprep.subr.mxu0 0.0
    %820 = vmatpush1.msra.mxu0 %v512
    %821 = vmatprep.subr.mxu0 0.0
    %822 = vmatpush1.msra.mxu0 %v513
    %823 = vmatprep.subr.mxu0 0.0
    %824 = vmatpush1.msra.mxu0 %v514
    %825 = vmatprep.subr.mxu0 0.0
    %826 = vmatpush1.msra.mxu0 %v515
    %827 = vmatprep.subr.mxu0 0.0
    %828 = vmatpush1.msra.mxu0 %v516
    %829 = vmatprep.subr.mxu0 0.0
    %830 = vmatpush1.msra.mxu0 %v517
    %831 = vmatprep.subr.mxu0 0.0
    %832 = vmatpush1.msra.mxu0 %v518
    %833 = vmatprep.subr.mxu0 0.0
    %834 = vmatpush1.msra.mxu0 %v519
    %835 = vmatprep.subr.mxu0 0.0
    %836 = vmatpush1.msra.mxu0 %v520
    %837 = vmatprep.subr.mxu0 0.0
    %838 = vmatpush1.msra.mxu0 %v521
    %839 = vmatprep.subr.mxu0 0.0
    %840 = vmatpush1.msra.mxu0 %v522
    %841 = vmatprep.subr.mxu0 0.0
    %842 = vmatpush1.msra.mxu0 %v523
    %843 = vmatprep.subr.mxu0 0.0
    %844 = vmatpush1.msra.mxu0 %v524
    %845 = vmatprep.subr.mxu0 0.0
    %846 = vmatpush1.msra.mxu0 %v525
    %847 = vmatprep.subr.mxu0 0.0
    %848 = vmatpush1.msra.mxu0 0.0
    %849 = vmatprep.subr.mxu0 0.0
    %850 = vmatpush1.msra.mxu0 0.0
    %851 = vmatprep.subr.mxu0 0.0
    %852 = vmatpush1.msra.mxu0 0.0
    %853 = vmatprep.mubr.f32.mxu0 %v577
    %854 = vmatmul.mubr.f32.gmra.mrb[0].mxu0 %v566
    %v855 = vpop.f32.mrb[0].mxu0
    %v856 = vadd.f32 %v786, %v855
    %v857 = vpop.f32.mrb[0].mxu0
    %858 = vdwg.mxu0
    %v859 = vmax.f32 %v856, 0.0
    %v860 = vand.u32 2147483647, %v856
    %v861 = vsub.f32 0.0, %v860
    %v862 = vmul.f32 %v861, 1.442695
    %v863 = vpow.pop %v862
    %v864 = vadd.f32 %v863, 1.0
    %v865 = vlog2.pop %v864
    %v866 = vmul.f32 %v865, 0.6931472
    %v867 = vmul.f32 -0.5, %v863
    %v868 = vadd.f32 %v867, 1.0
    %v869 = vmul.f32 %v868, %v863
    %v870 = vand.u32 2147483647, %v863
    %vm871 = vcmp.lt.f32.partialorder %v870, 0.0004427343
    %v872 = vsel %vm871, %v869, %v866
    %v873 = vadd.f32 %v859, %v872
    %vm874 = vcmask 58368
    %v875 = vsel %vm874, %v398, 0.0
    %876 = vadd.xlane.f32.xlu0 %v875
    %v877 = vpop.xlane.xlu0 %876
    %v878 = vadd.f32 %v877, 8.0
    %v879 = vsel %vm874, %v873, 0.0
    %880 = vadd.xlane.f32.xlu0 %v879
    %v881 = vpop.xlane.xlu0 %880
    %v882 = vadd.f32 %v881, 8.0
    %v883 = vmul.f32 %v398, %v882
    %v884 = vmul.f32 %v873, %v878
    %v885 = vadd.f32 %v883, %v884
    %v886 = vadd.f32 %v878, %v882
    %v887 = vrcp.pop %v886
    %v888 = vmul.f32 %v885, %v887
    %890 = vrot.lane.b32.xlu0 %v398, 8
    %v891 = vpop.permute.xlu0 %890
    %894 = vrot.lane.b32.xlu0 %v888, 16
    %v895 = vpop.permute.xlu0 %894
    %vm897 = vcmask 64512
    %v898 = vsel %vm897, %v873, %v891
    %vm899 = vcmask 130048
    %v900 = vsel %vm899, %v898, %v895
    %vm901 = vcmask 189440
    %902 = vst.msk [vmem:[#allocation2] sm:$0x3] %vm901, %v900
    // Predicated region
    $region26: #{tpu_custom_call.1} parent=1 // pred_check
      _
    $region27: #{tpu_custom_call.1} parent=1 // pred_check_branch
      %904 = sbr.rel (0) target = $region29
    $region28: #{tpu_custom_call.1} parent=1 // pred_region
      %s906 = ssub.s32 32, 32
      %907 = vsyncadd [#allocation3], %s906
      %s909 = sshll.u32 [#allocation2], 4
      %s910 = int_to_ptr.vmem [resolvable:$true] %s909
      %912 = dma.vmem_to_hbm [thread:$0]  %s910, 32, %s6, [#allocation3]
    $region29: #{tpu_custom_call.1} parent=1 // pred_fallthru
      _
    // Predicated region
    $region30: #{tpu_custom_call.1} parent=1 // pred_check
      _
    $region31: #{tpu_custom_call.1} parent=1 // pred_check_branch
      %914 = sbr.rel (0) target = $region33
    $region32: #{tpu_custom_call.1} parent=1 // pred_region
      %915 = dma.done [#allocation3], 32
    $region33: #{tpu_custom_call.1} parent=1 // pred_fallthru
      _
    %916 = vsyncpa [#allocation3], 1

</llo_original>
